<compile_context>
chip_gen: v7x
topology: tpu7x:2x2x1
jax: 0.10.0
libtpu: 0.0.40
codegen_flags: <defaults>
</compile_context>

<pallas_src>
import functools

import jax
import jax.numpy as jnp
from jax import lax
from jax.experimental import pallas as pl
from jax.experimental.pallas import tpu as pltpu

NEG_SLOPE = 0.01  # torch.nn.LeakyReLU default negative_slope


def _residual_block_kernel(x_ref, w1_ref, b1_ref, w2_ref, b2_ref, out_ref, *, H, W):
    # x_ref  : (N*C, H*W)   batch*channels on sublanes, flat spatial on lanes
    # w*_ref : (N*C, 9*N*C) block-diagonal per-batch packed conv weights
    # b*_ref : (N*C, 1)
    # out_ref: (N*C, H*W)
    R, HW = x_ref.shape
    x = x_ref[...]  # (R, HW) f32

    # ---- Border-validity masks, computed once at full (R, HW) and reused ----
    flat = lax.broadcasted_iota(jnp.int32, (R, HW), 1)  # within-image pixel index
    cols = flat % W                                      # x coordinate
    m_up = flat >= W               # valid for dy = -1 taps (not first row)
    m_dn = flat < (H - 1) * W      # valid for dy = +1 taps (not last row)
    m_lf = cols >= 1               # valid for dx = -1 taps (not first col)
    m_rt = cols <= W - 2           # valid for dx = +1 taps (not last col)

    def im2col(src):
        # Row bases (dy = -1, 0, +1), row-masked exactly once.
        up = jnp.where(m_up, pltpu.roll(src, W % HW, 1), 0.0)          # src[p - W]
        mid = src
        dn = jnp.where(m_dn, pltpu.roll(src, (-W) % HW, 1), 0.0)       # src[p + W]
        rows = []
        for base in (up, mid, dn):
            left = jnp.where(m_lf, pltpu.roll(base, 1 % HW, 1), 0.0)   # base[p - 1]
            right = jnp.where(m_rt, pltpu.roll(base, (-1) % HW, 1), 0.0)  # base[p + 1]
            rows.extend([left, base, right])                           # dx = -1, 0, +1
        # Tap-major stack (tap = ky*3 + kx), each block keeps original row order.
        return jnp.concatenate(rows, axis=0)                           # (9*R, HW)

    def conv3x3(src, w_ref, b_ref):
        stacked = im2col(src)                                          # (9*R, HW)
        y = jnp.dot(w_ref[...], stacked, preferred_element_type=jnp.float32)
        return y + b_ref[...]                                          # (R, 1) bcast

    z = conv3x3(x, w1_ref, b1_ref)
    a = jnp.where(z > 0, z, NEG_SLOPE * z)          # LeakyReLU(0.01)
    y = conv3x3(a, w2_ref, b2_ref)
    out_ref[...] = (x + y).astype(out_ref.dtype)    # residual add, lane-dense store


def _pack_weights(w, b, N, C):
    """HWIO (3,3,ci,co) -> block-diagonal-over-batch (N*C, 9*N*C), bias -> (N*C, 1)."""
    wt = jnp.transpose(w, (0, 1, 3, 2)).reshape(9, C, C).astype(jnp.float32)  # (tap, co, ci)
    eye_n = jnp.eye(N, dtype=jnp.float32)
    blocks = [jnp.kron(eye_n, wt[t]) for t in range(9)]       # each (N*C, N*C)
    w_big = jnp.concatenate(blocks, axis=1)                   # (N*C, 9*N*C)
    b_big = jnp.tile(b.astype(jnp.float32), (N,)).reshape(N * C, 1)
    return w_big, b_big


def residual_block(x_nchw, w1, b1, w2, b2):
    """x_nchw: (N, C, H, W) f32. w*: (3,3,C,C) HWIO (kh, kw, ci, co). b*: (C,)."""
    N, C, H, W = x_nchw.shape
    HW = H * W
    R = N * C

    # Free contiguous reshape: batch*channels -> sublanes, flat spatial -> lanes.
    x2d = x_nchw.reshape(R, HW).astype(jnp.float32)

    w1m, b1c = _pack_weights(w1, b1, N, C)
    w2m, b2c = _pack_weights(w2, b2, N, C)

    flops = 2 * N * HW * (2 * 9 * C * C)            # two 3x3 convs, MAC = 2 flops
    bytes_accessed = (2 * R * HW + 2 * (R * 9 * R + R)) * 4
    cost = pl.CostEstimate(flops=flops, transcendentals=0, bytes_accessed=bytes_accessed)

    out2d = pl.pallas_call(
        functools.partial(_residual_block_kernel, H=H, W=W),
        out_shape=jax.ShapeDtypeStruct((R, HW), jnp.float32),
        grid_spec=pltpu.PrefetchScalarGridSpec(
            num_scalar_prefetch=0,
            grid=(1,),                                   # one block: whole batch
            in_specs=[
                pl.BlockSpec((R, HW), lambda i: (0, 0)),
                pl.BlockSpec((R, 9 * R), lambda i: (0, 0)),
                pl.BlockSpec((R, 1), lambda i: (0, 0)),
                pl.BlockSpec((R, 9 * R), lambda i: (0, 0)),
                pl.BlockSpec((R, 1), lambda i: (0, 0)),
            ],
            out_specs=pl.BlockSpec((R, HW), lambda i: (0, 0)),
        ),
        compiler_params=pltpu.CompilerParams(dimension_semantics=("arbitrary",)),
        cost_estimate=cost,
    )(x2d, w1m, b1c, w2m, b2c)

    return out2d.reshape(N, C, H, W)  # free reshape back to NCHW


def _reference(x_nchw, w1, b1, w2, b2):
    """Pure-JAX reference matching PyTorch semantics (cross-correlation, pad=1)."""
    x = jnp.transpose(x_nchw, (0, 2, 3, 1)).astype(jnp.float32)

    def conv(t, w, b):
        y = lax.conv_general_dilated(
            t, w, window_strides=(1, 1), padding="SAME",
            dimension_numbers=("NHWC", "HWIO", "NHWC"))
        return y + b.reshape(1, 1, 1, -1)

    h = conv(x, w1, b1)
    h = jnp.where(h > 0, h, NEG_SLOPE * h)
    y = x + conv(h, w2, b2)
    return jnp.transpose(y, (0, 3, 1, 2))


if __name__ == "__main__":
    N, C, H, W = 2, 4, 16, 16
    key = jax.random.PRNGKey(0)
    kx, kw1, kb1, kw2, kb2 = jax.random.split(key, 5)

    # Deterministic parameter init (uniform with PyTorch-like bound 1/sqrt(fan_in)).
    bound = 1.0 / jnp.sqrt(jnp.float32(C * 3 * 3))
    x = jax.random.normal(kx, (N, C, H, W), dtype=jnp.float32)
    w1 = jax.random.uniform(kw1, (3, 3, C, C), jnp.float32, -bound, bound)  # (kh, kw, ci, co)
    b1 = jax.random.uniform(kb1, (C,), jnp.float32, -bound, bound)
    w2 = jax.random.uniform(kw2, (3, 3, C, C), jnp.float32, -bound, bound)
    b2 = jax.random.uniform(kb2, (C,), jnp.float32, -bound, bound)

    out = jax.block_until_ready(residual_block(x, w1, b1, w2, b2))
    ref = jax.block_until_ready(_reference(x, w1, b1, w2, b2))

    assert out.shape == (N, C, H, W) and out.dtype == jnp.float32
    assert jnp.allclose(out, ref, atol=1e-4, rtol=1e-4), "mismatch vs reference"
    print("KERNEL_OK")
</pallas_src>

<mosaic_0001>
module attributes {stable_mosaic.version = 11 : i64} {
  func.func @_residual_block_kernel(%arg0: i32, %arg1: memref<8x256xf32, #tpu.memory_space<vmem>>, %arg2: memref<8x72xf32, #tpu.memory_space<vmem>>, %arg3: memref<8x1xf32, #tpu.memory_space<vmem>>, %arg4: memref<8x72xf32, #tpu.memory_space<vmem>>, %arg5: memref<8x1xf32, #tpu.memory_space<vmem>>, %arg6: memref<8x256xf32, #tpu.memory_space<vmem>>) attributes {dimension_semantics = [#tpu.dimension_semantics<arbitrary>], iteration_bounds = array<i64: 1>, scalar_prefetch = 0 : i64, scratch_operands = 0 : i64, tpu.core_type = #tpu.core_type<tc>, window_params = [{pipeline_mode = #tpu.pipeline_mode<synchronous>, transform_indices = @transform_0, window_bounds = array<i64: 8, 256>}, {pipeline_mode = #tpu.pipeline_mode<synchronous>, transform_indices = @transform_1, window_bounds = array<i64: 8, 72>}, {pipeline_mode = #tpu.pipeline_mode<synchronous>, transform_indices = @transform_2, window_bounds = array<i64: 8, 1>}, {pipeline_mode = #tpu.pipeline_mode<synchronous>, transform_indices = @transform_3, window_bounds = array<i64: 8, 72>}, {pipeline_mode = #tpu.pipeline_mode<synchronous>, transform_indices = @transform_4, window_bounds = array<i64: 8, 1>}, {pipeline_mode = #tpu.pipeline_mode<synchronous>, transform_indices = @transform_5, window_bounds = array<i64: 8, 256>}]} {
    %c0 = arith.constant 0 : index
    %c0_0 = arith.constant 0 : index
    %0 = vector.load %arg1[%c0, %c0_0] : memref<8x256xf32, #tpu.memory_space<vmem>>, vector<8x256xf32>
    %1 = tpu.iota {dimensions = array<i32: 1>} : vector<8x256xi32>
    %c16_i32 = arith.constant 16 : i32
    %c0_i32 = arith.constant 0 : i32
    %2 = arith.cmpi eq, %c16_i32, %c0_i32 : i32
    %c1_i32 = arith.constant 1 : i32
    %3 = arith.select %2, %c1_i32, %c16_i32 : i32
    %4 = vector.broadcast %3 : i32 to vector<8x256xi32>
    %5 = arith.remsi %1, %4 : vector<8x256xi32>
    %c0_i32_1 = arith.constant 0 : i32
    %6 = vector.broadcast %c0_i32_1 : i32 to vector<8x256xi32>
    %7 = arith.cmpi ne, %5, %6 : vector<8x256xi32>
    %c0_i32_2 = arith.constant 0 : i32
    %8 = vector.broadcast %c0_i32_2 : i32 to vector<8x256xi32>
    %9 = arith.cmpi slt, %5, %8 : vector<8x256xi32>
    %c0_i32_3 = arith.constant 0 : i32
    %10 = arith.cmpi slt, %3, %c0_i32_3 : i32
    %11 = vector.broadcast %10 : i1 to vector<8x256xi1>
    %12 = vector.broadcast %11 : vector<8x256xi1> to vector<8x256xi1>
    %13 = arith.xori %9, %12 : vector<8x256xi1>
    %14 = arith.andi %13, %7 : vector<8x256xi1>
    %15 = vector.broadcast %3 : i32 to vector<8x256xi32>
    %16 = arith.addi %5, %15 : vector<8x256xi32>
    %17 = arith.select %14, %16, %5 : vector<8x256xi1>, vector<8x256xi32>
    %c16_i32_4 = arith.constant 16 : i32
    %18 = vector.broadcast %c16_i32_4 : i32 to vector<8x256xi32>
    %19 = arith.cmpi sge, %1, %18 : vector<8x256xi32>
    %c240_i32 = arith.constant 240 : i32
    %20 = vector.broadcast %c240_i32 : i32 to vector<8x256xi32>
    %21 = arith.cmpi slt, %1, %20 : vector<8x256xi32>
    %c1_i32_5 = arith.constant 1 : i32
    %22 = vector.broadcast %c1_i32_5 : i32 to vector<8x256xi32>
    %23 = arith.cmpi sge, %17, %22 : vector<8x256xi32>
    %c14_i32 = arith.constant 14 : i32
    %24 = vector.broadcast %c14_i32 : i32 to vector<8x256xi32>
    %25 = arith.cmpi sle, %17, %24 : vector<8x256xi32>
    %c16_i32_6 = arith.constant 16 : i32
    %26 = tpu.dynamic_rotate %0 by %c16_i32_6 dim 1 : vector<8x256xf32>, i32 -> vector<8x256xf32>
    %cst = arith.constant 0.000000e+00 : f32
    %27 = vector.broadcast %cst : f32 to vector<8x256xf32>
    %28 = arith.select %19, %26, %27 : vector<8x256xi1>, vector<8x256xf32>
    %c240_i32_7 = arith.constant 240 : i32
    %29 = tpu.dynamic_rotate %0 by %c240_i32_7 dim 1 : vector<8x256xf32>, i32 -> vector<8x256xf32>
    %cst_8 = arith.constant 0.000000e+00 : f32
    %30 = vector.broadcast %cst_8 : f32 to vector<8x256xf32>
    %31 = arith.select %21, %29, %30 : vector<8x256xi1>, vector<8x256xf32>
    %c1_i32_9 = arith.constant 1 : i32
    %32 = tpu.dynamic_rotate %28 by %c1_i32_9 dim 1 : vector<8x256xf32>, i32 -> vector<8x256xf32>
    %cst_10 = arith.constant 0.000000e+00 : f32
    %33 = vector.broadcast %cst_10 : f32 to vector<8x256xf32>
    %34 = arith.select %23, %32, %33 : vector<8x256xi1>, vector<8x256xf32>
    %c255_i32 = arith.constant 255 : i32
    %35 = tpu.dynamic_rotate %28 by %c255_i32 dim 1 : vector<8x256xf32>, i32 -> vector<8x256xf32>
    %cst_11 = arith.constant 0.000000e+00 : f32
    %36 = vector.broadcast %cst_11 : f32 to vector<8x256xf32>
    %37 = arith.select %25, %35, %36 : vector<8x256xi1>, vector<8x256xf32>
    %c1_i32_12 = arith.constant 1 : i32
    %38 = tpu.dynamic_rotate %0 by %c1_i32_12 dim 1 : vector<8x256xf32>, i32 -> vector<8x256xf32>
    %cst_13 = arith.constant 0.000000e+00 : f32
    %39 = vector.broadcast %cst_13 : f32 to vector<8x256xf32>
    %40 = arith.select %23, %38, %39 : vector<8x256xi1>, vector<8x256xf32>
    %c255_i32_14 = arith.constant 255 : i32
    %41 = tpu.dynamic_rotate %0 by %c255_i32_14 dim 1 : vector<8x256xf32>, i32 -> vector<8x256xf32>
    %cst_15 = arith.constant 0.000000e+00 : f32
    %42 = vector.broadcast %cst_15 : f32 to vector<8x256xf32>
    %43 = arith.select %25, %41, %42 : vector<8x256xi1>, vector<8x256xf32>
    %c1_i32_16 = arith.constant 1 : i32
    %44 = tpu.dynamic_rotate %31 by %c1_i32_16 dim 1 : vector<8x256xf32>, i32 -> vector<8x256xf32>
    %cst_17 = arith.constant 0.000000e+00 : f32
    %45 = vector.broadcast %cst_17 : f32 to vector<8x256xf32>
    %46 = arith.select %23, %44, %45 : vector<8x256xi1>, vector<8x256xf32>
    %c255_i32_18 = arith.constant 255 : i32
    %47 = tpu.dynamic_rotate %31 by %c255_i32_18 dim 1 : vector<8x256xf32>, i32 -> vector<8x256xf32>
    %cst_19 = arith.constant 0.000000e+00 : f32
    %48 = vector.broadcast %cst_19 : f32 to vector<8x256xf32>
    %49 = arith.select %25, %47, %48 : vector<8x256xi1>, vector<8x256xf32>
    %50 = tpu.concatenate %34, %28, %37, %40, %0, %43, %46, %31, %49 in 0 : vector<8x256xf32>, vector<8x256xf32>, vector<8x256xf32>, vector<8x256xf32>, vector<8x256xf32>, vector<8x256xf32>, vector<8x256xf32>, vector<8x256xf32>, vector<8x256xf32> -> vector<72x256xf32>
    %c0_20 = arith.constant 0 : index
    %c0_21 = arith.constant 0 : index
    %51 = vector.load %arg2[%c0_20, %c0_21] : memref<8x72xf32, #tpu.memory_space<vmem>>, vector<8x72xf32>
    %cst_22 = arith.constant dense<0.000000e+00> : vector<8x256xf32>
    %52 = tpu.matmul %51, %50, %cst_22 {dimension_numbers = #tpu.dot_dimension_numbers<[1], [0], [0], [1], [0, 0, 1, 1], [], []>} : vector<8x72xf32>, vector<72x256xf32>, vector<8x256xf32> -> vector<8x256xf32>
    %c0_23 = arith.constant 0 : index
    %c0_24 = arith.constant 0 : index
    %53 = vector.load %arg3[%c0_23, %c0_24] : memref<8x1xf32, #tpu.memory_space<vmem>>, vector<8x1xf32>
    %54 = vector.broadcast %53 : vector<8x1xf32> to vector<8x256xf32>
    %55 = arith.addf %52, %54 : vector<8x256xf32>
    %cst_25 = arith.constant 0.000000e+00 : f32
    %56 = vector.broadcast %cst_25 : f32 to vector<8x256xf32>
    %57 = arith.cmpf ogt, %55, %56 : vector<8x256xf32>
    %cst_26 = arith.constant 0.00999999977 : f32
    %58 = vector.broadcast %cst_26 : f32 to vector<8x256xf32>
    %59 = arith.mulf %58, %55 : vector<8x256xf32>
    %60 = arith.select %57, %55, %59 : vector<8x256xi1>, vector<8x256xf32>
    %c16_i32_27 = arith.constant 16 : i32
    %61 = tpu.dynamic_rotate %60 by %c16_i32_27 dim 1 : vector<8x256xf32>, i32 -> vector<8x256xf32>
    %cst_28 = arith.constant 0.000000e+00 : f32
    %62 = vector.broadcast %cst_28 : f32 to vector<8x256xf32>
    %63 = arith.select %19, %61, %62 : vector<8x256xi1>, vector<8x256xf32>
    %c240_i32_29 = arith.constant 240 : i32
    %64 = tpu.dynamic_rotate %60 by %c240_i32_29 dim 1 : vector<8x256xf32>, i32 -> vector<8x256xf32>
    %cst_30 = arith.constant 0.000000e+00 : f32
    %65 = vector.broadcast %cst_30 : f32 to vector<8x256xf32>
    %66 = arith.select %21, %64, %65 : vector<8x256xi1>, vector<8x256xf32>
    %c1_i32_31 = arith.constant 1 : i32
    %67 = tpu.dynamic_rotate %63 by %c1_i32_31 dim 1 : vector<8x256xf32>, i32 -> vector<8x256xf32>
    %cst_32 = arith.constant 0.000000e+00 : f32
    %68 = vector.broadcast %cst_32 : f32 to vector<8x256xf32>
    %69 = arith.select %23, %67, %68 : vector<8x256xi1>, vector<8x256xf32>
    %c255_i32_33 = arith.constant 255 : i32
    %70 = tpu.dynamic_rotate %63 by %c255_i32_33 dim 1 : vector<8x256xf32>, i32 -> vector<8x256xf32>
    %cst_34 = arith.constant 0.000000e+00 : f32
    %71 = vector.broadcast %cst_34 : f32 to vector<8x256xf32>
    %72 = arith.select %25, %70, %71 : vector<8x256xi1>, vector<8x256xf32>
    %c1_i32_35 = arith.constant 1 : i32
    %73 = tpu.dynamic_rotate %60 by %c1_i32_35 dim 1 : vector<8x256xf32>, i32 -> vector<8x256xf32>
    %cst_36 = arith.constant 0.000000e+00 : f32
    %74 = vector.broadcast %cst_36 : f32 to vector<8x256xf32>
    %75 = arith.select %23, %73, %74 : vector<8x256xi1>, vector<8x256xf32>
    %c255_i32_37 = arith.constant 255 : i32
    %76 = tpu.dynamic_rotate %60 by %c255_i32_37 dim 1 : vector<8x256xf32>, i32 -> vector<8x256xf32>
    %cst_38 = arith.constant 0.000000e+00 : f32
    %77 = vector.broadcast %cst_38 : f32 to vector<8x256xf32>
    %78 = arith.select %25, %76, %77 : vector<8x256xi1>, vector<8x256xf32>
    %c1_i32_39 = arith.constant 1 : i32
    %79 = tpu.dynamic_rotate %66 by %c1_i32_39 dim 1 : vector<8x256xf32>, i32 -> vector<8x256xf32>
    %cst_40 = arith.constant 0.000000e+00 : f32
    %80 = vector.broadcast %cst_40 : f32 to vector<8x256xf32>
    %81 = arith.select %23, %79, %80 : vector<8x256xi1>, vector<8x256xf32>
    %c255_i32_41 = arith.constant 255 : i32
    %82 = tpu.dynamic_rotate %66 by %c255_i32_41 dim 1 : vector<8x256xf32>, i32 -> vector<8x256xf32>
    %cst_42 = arith.constant 0.000000e+00 : f32
    %83 = vector.broadcast %cst_42 : f32 to vector<8x256xf32>
    %84 = arith.select %25, %82, %83 : vector<8x256xi1>, vector<8x256xf32>
    %85 = tpu.concatenate %69, %63, %72, %75, %60, %78, %81, %66, %84 in 0 : vector<8x256xf32>, vector<8x256xf32>, vector<8x256xf32>, vector<8x256xf32>, vector<8x256xf32>, vector<8x256xf32>, vector<8x256xf32>, vector<8x256xf32>, vector<8x256xf32> -> vector<72x256xf32>
    %c0_43 = arith.constant 0 : index
    %c0_44 = arith.constant 0 : index
    %86 = vector.load %arg4[%c0_43, %c0_44] : memref<8x72xf32, #tpu.memory_space<vmem>>, vector<8x72xf32>
    %cst_45 = arith.constant dense<0.000000e+00> : vector<8x256xf32>
    %87 = tpu.matmul %86, %85, %cst_45 {dimension_numbers = #tpu.dot_dimension_numbers<[1], [0], [0], [1], [0, 0, 1, 1], [], []>} : vector<8x72xf32>, vector<72x256xf32>, vector<8x256xf32> -> vector<8x256xf32>
    %c0_46 = arith.constant 0 : index
    %c0_47 = arith.constant 0 : index
    %88 = vector.load %arg5[%c0_46, %c0_47] : memref<8x1xf32, #tpu.memory_space<vmem>>, vector<8x1xf32>
    %89 = vector.broadcast %88 : vector<8x1xf32> to vector<8x256xf32>
    %90 = arith.addf %87, %89 : vector<8x256xf32>
    %91 = arith.addf %0, %90 : vector<8x256xf32>
    %c0_48 = arith.constant 0 : index
    %c0_49 = arith.constant 0 : index
    %92 = vector.load %arg6[%c0_48, %c0_49] : memref<8x256xf32, #tpu.memory_space<vmem>>, vector<8x256xf32>
    tpu.vector_store %arg6[%c0_48, %c0_49], %91 {strides = array<i32>} : memref<8x256xf32, #tpu.memory_space<vmem>>, vector<8x256xf32>,
    return
  }
  func.func @transform_0(%arg0: i32) -> (i32, i32) {
    %c0_i32 = arith.constant 0 : i32
    %c0_i32_0 = arith.constant 0 : i32
    %c0_i32_1 = arith.constant 0 : i32
    return %c0_i32, %c0_i32_0 : i32, i32
  }
  func.func @transform_1(%arg0: i32) -> (i32, i32) {
    %c0_i32 = arith.constant 0 : i32
    %c0_i32_0 = arith.constant 0 : i32
    %c0_i32_1 = arith.constant 0 : i32
    return %c0_i32, %c0_i32_0 : i32, i32
  }
  func.func @transform_2(%arg0: i32) -> (i32, i32) {
    %c0_i32 = arith.constant 0 : i32
    %c0_i32_0 = arith.constant 0 : i32
    %c0_i32_1 = arith.constant 0 : i32
    return %c0_i32, %c0_i32_0 : i32, i32
  }
  func.func @transform_3(%arg0: i32) -> (i32, i32) {
    %c0_i32 = arith.constant 0 : i32
    %c0_i32_0 = arith.constant 0 : i32
    %c0_i32_1 = arith.constant 0 : i32
    return %c0_i32, %c0_i32_0 : i32, i32
  }
  func.func @transform_4(%arg0: i32) -> (i32, i32) {
    %c0_i32 = arith.constant 0 : i32
    %c0_i32_0 = arith.constant 0 : i32
    %c0_i32_1 = arith.constant 0 : i32
    return %c0_i32, %c0_i32_0 : i32, i32
  }
  func.func @transform_5(%arg0: i32) -> (i32, i32) {
    %c0_i32 = arith.constant 0 : i32
    %c0_i32_0 = arith.constant 0 : i32
    %c0_i32_1 = arith.constant 0 : i32
    return %c0_i32, %c0_i32_0 : i32, i32
  }
}

</mosaic_0001>

<llo_original>
// kernel: tpu_custom_call.1
$region0: #{tpu_custom_call.1}
  #allocation0 [shape = 'u32[]', space=smem, size = 0x4, offset = 0x4, fixed_abs, tag = 'smem constant byte address 0x4 - core index']
  #allocation1 [shape = 'u32[144,128]{1,0:T(1,128)}', space=vmem, size = 0x12000, scoped, tag = 'internal scratch']
  %s0 = inlined_call_operand.vmem [shape: f32[8,256], index: 0, kind: input, shape index: {}]
  %s1 = inlined_call_operand.hbm [shape: f32[8,72], index: 1, kind: input, shape index: {}]
  %s2 = inlined_call_operand.vmem [shape: f32[8,1], index: 2, kind: input, shape index: {}]
  %s3 = inlined_call_operand.vmem [shape: f32[8,72], index: 3, kind: input, shape index: {}]
  %s4 = inlined_call_operand.vmem [shape: f32[8,1], index: 4, kind: input, shape index: {}]
  %s5 = inlined_call_operand.hbm [shape: f32[8,256], index: 5, kind: output, shape index: {}]
  %s6 = sld [smem:[#allocation0]]
  $region34: #{tpu_custom_call.1} parent=0
    _
  %s8 = ssub.s32 1, %s6
  %s9 = scalar_select 0, %s8, %s6
  $region1: #{tpu_custom_call.1} parent=0
    #allocation2 [shape = 'u8[4096]{0}', space=vmem, size = 0x1000, scoped, tag = 'input window, operand 1, single buffered']
    #allocation3 [shape = 's32[1]{0}', space=sflag, size = 0x4, scoped, tag = 'scoped memory for tpu_custom_call.1']
    #allocation4 [shape = 's32[1]{0}', space=sflag, size = 0x4, scoped, tag = 'scoped memory for tpu_custom_call.1']
    #allocation5 [shape = 'u8[8192]{0}', space=vmem, size = 0x2000, scoped, tag = 'output window, operand 0, single buffered']
    %10 = vsyncpa [#allocation3], 0
    %11 = vsyncpa [#allocation4], 0
    // Predicated region
    $region2: #{tpu_custom_call.1} parent=1 // pred_check
      _
    $region3: #{tpu_custom_call.1} parent=1 // pred_check_branch
      %13 = sbr.rel (0) target = $region5
    $region4: #{tpu_custom_call.1} parent=1 // pred_region
      _
    $region5: #{tpu_custom_call.1} parent=1 // pred_fallthru
      _
    // Predicated region
    $region6: #{tpu_custom_call.1} parent=1 // pred_check
      _
    $region7: #{tpu_custom_call.1} parent=1 // pred_check_branch
      %15 = sbr.rel (0) target = $region9
    $region8: #{tpu_custom_call.1} parent=1 // pred_region
      %s17 = ssub.s32 128, 128
      %18 = vsyncadd [#allocation3], %s17
      %s20 = sshll.u32 [#allocation2], 4
      %s21 = int_to_ptr.vmem [resolvable:$true] %s20
      %23 = dma.hbm_to_vmem [thread:$0]  %s1, 128, %s21, [#allocation3]
    $region9: #{tpu_custom_call.1} parent=1 // pred_fallthru
      _
    // Predicated region
    $region10: #{tpu_custom_call.1} parent=1 // pred_check
      _
    $region11: #{tpu_custom_call.1} parent=1 // pred_check_branch
      %25 = sbr.rel (0) target = $region13
    $region12: #{tpu_custom_call.1} parent=1 // pred_region
      _
    $region13: #{tpu_custom_call.1} parent=1 // pred_fallthru
      _
    // Predicated region
    $region14: #{tpu_custom_call.1} parent=1 // pred_check
      _
    $region15: #{tpu_custom_call.1} parent=1 // pred_check_branch
      %27 = sbr.rel (0) target = $region17
    $region16: #{tpu_custom_call.1} parent=1 // pred_region
      _
    $region17: #{tpu_custom_call.1} parent=1 // pred_fallthru
      _
    // Predicated region
    $region18: #{tpu_custom_call.1} parent=1 // pred_check
      _
    $region19: #{tpu_custom_call.1} parent=1 // pred_check_branch
      %29 = sbr.rel (0) target = $region21
    $region20: #{tpu_custom_call.1} parent=1 // pred_region
      _
    $region21: #{tpu_custom_call.1} parent=1 // pred_fallthru
      _
    // Predicated region
    $region22: #{tpu_custom_call.1} parent=1 // pred_check
      _
    $region23: #{tpu_custom_call.1} parent=1 // pred_check_branch
      %31 = sbr.rel (0) target = $region25
    $region24: #{tpu_custom_call.1} parent=1 // pred_region
      %32 = dma.done [#allocation3], 128
    $region25: #{tpu_custom_call.1} parent=1 // pred_fallthru
      _
    %v33 = vld [vmem:[%s0] sm:$0xff]
    %v34 = vld [vmem:[%s0 + $0x8] sm:$0xff]
    %v35 = vlaneseq
    %v36 = vand.u32 %v35, 127
    %v37 = vadd.s32 %v36, 128
    %vm38 = vcmp.lt.s32.totalorder %v36, 0
    %v39 = vsub.s32 0, %v36
    %v40 = vsel %vm38, %v39, %v36
    %v41 = vshrl.u32 %v40, 4
    %v42 = vand.u32 %v40, 15
    %v43 = vsub.s32 0, %v42
    %v44 = vsel %vm38, %v43, %v42
    %vm45 = vcmp.lt.s32.totalorder %v37, 0
    %v46 = vsub.s32 0, %v37
    %v47 = vsel %vm45, %v46, %v37
    %v48 = vshrl.u32 %v47, 4
    %v49 = vand.u32 %v47, 15
    %v50 = vsub.s32 0, %v49
    %v51 = vsel %vm45, %v50, %v49
    %vm52 = vcmp.ne.s32.totalorder %v44, 0
    %vm53 = vcmp.ne.s32.totalorder %v51, 0
    %vm54 = vcmp.lt.s32.totalorder %v44, 0
    %vm55 = vcmp.lt.s32.totalorder %v51, 0
    %vm56 = vmand %vm54, %vm52
    %vm57 = vmand %vm55, %vm53
    %v58 = vadd.s32 %v44, 16
    %v59 = vadd.s32 %v51, 16
    %v60 = vsel %vm56, %v58, %v44
    %v61 = vsel %vm57, %v59, %v51
    %vm62 = vcmp.ge.s32.totalorder %v36, 16
    %vm63 = vcmp.ge.s32.totalorder %v37, 16
    %vm64 = vcmp.lt.s32.totalorder %v36, 240
    %vm65 = vcmp.lt.s32.totalorder %v37, 240
    %vm66 = vcmp.ge.s32.totalorder %v60, 1
    %vm67 = vcmp.ge.s32.totalorder %v61, 1
    %vm68 = vcmp.le.s32.totalorder %v60, 14
    %vm69 = vcmp.le.s32.totalorder %v61, 14
    %70 = vrot.lane.b32.xlu0 %v33, 16
    %v71 = vpop.permute.xlu0 %70
    %72 = vrot.lane.b32.xlu0 %v34, 16
    %v73 = vpop.permute.xlu0 %72
    %vm74 = vcmp.lt.s32.totalorder %v36, 16
    %v75 = vsel %vm74, %v71, %v73
    %v76 = vsel %vm74, %v73, %v71
    %v77 = vsel %vm62, %v76, 0.0
    %v78 = vsel %vm63, %v75, 0.0
    %79 = vrot.lane.b32.xlu0 %v33, 112
    %v80 = vpop.permute.xlu0 %79
    %81 = vrot.lane.b32.xlu0 %v34, 112
    %v82 = vpop.permute.xlu0 %81
    %vm83 = vcmp.lt.s32.totalorder %v36, 112
    %v84 = vsel %vm83, %v80, %v82
    %v85 = vsel %vm83, %v82, %v80
    %v86 = vsel %vm64, %v84, 0.0
    %v87 = vsel %vm65, %v85, 0.0
    %88 = vrot.lane.b32.xlu0 %v77, 1
    %v89 = vpop.permute.xlu0 %88
    %90 = vrot.lane.b32.xlu0 %v78, 1
    %v91 = vpop.permute.xlu0 %90
    %vm92 = vcmp.lt.s32.totalorder %v36, 1
    %v93 = vsel %vm92, %v89, %v91
    %v94 = vsel %vm92, %v91, %v89
    %v95 = vsel %vm66, %v94, 0.0
    %v96 = vsel %vm67, %v93, 0.0
    %97 = vrot.lane.b32.xlu0 %v77, 127
    %v98 = vpop.permute.xlu0 %97
    %99 = vrot.lane.b32.xlu0 %v78, 127
    %v100 = vpop.permute.xlu0 %99
    %vm101 = vcmp.lt.s32.totalorder %v36, 127
    %v102 = vsel %vm101, %v98, %v100
    %v103 = vsel %vm101, %v100, %v98
    %v104 = vsel %vm68, %v102, 0.0
    %v105 = vsel %vm69, %v103, 0.0
    %106 = vrot.lane.b32.xlu0 %v33, 1
    %v107 = vpop.permute.xlu0 %106
    %108 = vrot.lane.b32.xlu0 %v34, 1
    %v109 = vpop.permute.xlu0 %108
    %v110 = vsel %vm92, %v107, %v109
    %v111 = vsel %vm92, %v109, %v107
    %v112 = vsel %vm66, %v111, 0.0
    %v113 = vsel %vm67, %v110, 0.0
    %114 = vrot.lane.b32.xlu0 %v33, 127
    %v115 = vpop.permute.xlu0 %114
    %116 = vrot.lane.b32.xlu0 %v34, 127
    %v117 = vpop.permute.xlu0 %116
    %v118 = vsel %vm101, %v115, %v117
    %v119 = vsel %vm101, %v117, %v115
    %v120 = vsel %vm68, %v118, 0.0
    %v121 = vsel %vm69, %v119, 0.0
    %122 = vrot.lane.b32.xlu0 %v86, 1
    %v123 = vpop.permute.xlu0 %122
    %124 = vrot.lane.b32.xlu0 %v87, 1
    %v125 = vpop.permute.xlu0 %124
    %v126 = vsel %vm92, %v123, %v125
    %v127 = vsel %vm92, %v125, %v123
    %v128 = vsel %vm66, %v127, 0.0
    %v129 = vsel %vm67, %v126, 0.0
    %130 = vrot.lane.b32.xlu0 %v86, 127
    %v131 = vpop.permute.xlu0 %130
    %132 = vrot.lane.b32.xlu0 %v87, 127
    %v133 = vpop.permute.xlu0 %132
    %v134 = vsel %vm101, %v131, %v133
    %v135 = vsel %vm101, %v133, %v131
    %v136 = vsel %vm68, %v134, 0.0
    %v137 = vsel %vm69, %v135, 0.0
    %v138 = vld [vmem:[#allocation2] sm:$0xff]
    %v139 = vld [vmem:[%s2] sm:$0xff]
    %141 = vset.pattern.permute.xlu0 0
    %142 = vperm.xlu0 %141, %v139
    %v143 = vpop.permute.xlu0 %142
    %vm145 = vcmask 588800
    %v147 = vsel %vm145, %v138, 0
    %149 = vmatprep.subr.mxu0 %v96
    %150 = vmatpush1.msra.mxu0 %v95
    %151 = vmatprep.subr.mxu0 %v78
    %152 = vmatpush1.msra.mxu0 %v77
    %153 = vmatprep.subr.mxu0 %v105
    %154 = vmatpush1.msra.mxu0 %v104
    %155 = vmatprep.subr.mxu0 %v113
    %156 = vmatpush1.msra.mxu0 %v112
    %157 = vmatprep.subr.mxu0 %v34
    %158 = vmatpush1.msra.mxu0 %v33
    %159 = vmatprep.subr.mxu0 %v121
    %160 = vmatpush1.msra.mxu0 %v120
    %161 = vmatprep.subr.mxu0 %v129
    %162 = vmatpush1.msra.mxu0 %v128
    %163 = vmatprep.subr.mxu0 %v87
    %164 = vmatpush1.msra.mxu0 %v86
    %165 = vmatprep.subr.mxu0 %v137
    %166 = vmatpush1.msra.mxu0 %v136
    %167 = vmatprep.subr.mxu0 0.0
    %168 = vmatpush1.msra.mxu0 0.0
    %169 = vmatprep.subr.mxu0 0.0
    %170 = vmatpush1.msra.mxu0 0.0
    %171 = vmatprep.subr.mxu0 0.0
    %172 = vmatpush1.msra.mxu0 0.0
    %173 = vmatprep.subr.mxu0 0.0
    %174 = vmatpush1.msra.mxu0 0.0
    %175 = vmatprep.subr.mxu0 0.0
    %176 = vmatpush1.msra.mxu0 0.0
    %177 = vmatprep.subr.mxu0 0.0
    %178 = vmatpush1.msra.mxu0 0.0
    %179 = vmatprep.subr.mxu0 0.0
    %180 = vmatpush1.msra.mxu0 0.0
    %181 = vmatprep.subr.mxu0 0.0
    %182 = vmatpush1.msra.mxu0 0.0
    %183 = vmatprep.subr.mxu0 0.0
    %184 = vmatpush1.msra.mxu0 0.0
    %185 = vmatprep.subr.mxu0 0.0
    %186 = vmatpush1.msra.mxu0 0.0
    %187 = vmatprep.subr.mxu0 0.0
    %188 = vmatpush1.msra.mxu0 0.0
    %189 = vmatprep.subr.mxu0 0.0
    %190 = vmatpush1.msra.mxu0 0.0
    %191 = vmatprep.subr.mxu0 0.0
    %192 = vmatpush1.msra.mxu0 0.0
    %193 = vmatprep.subr.mxu0 0.0
    %194 = vmatpush1.msra.mxu0 0.0
    %195 = vmatprep.subr.mxu0 0.0
    %196 = vmatpush1.msra.mxu0 0.0
    %197 = vmatprep.subr.mxu0 0.0
    %198 = vmatpush1.msra.mxu0 0.0
    %199 = vmatprep.subr.mxu0 0.0
    %200 = vmatpush1.msra.mxu0 0.0
    %201 = vmatprep.subr.mxu0 0.0
    %202 = vmatpush1.msra.mxu0 0.0
    %203 = vmatprep.subr.mxu0 0.0
    %204 = vmatpush1.msra.mxu0 0.0
    %205 = vmatprep.subr.mxu0 0.0
    %206 = vmatpush1.msra.mxu0 0.0
    %207 = vmatprep.subr.mxu0 0.0
    %208 = vmatpush1.msra.mxu0 0.0
    %209 = vmatprep.subr.mxu0 0.0
    %210 = vmatpush1.msra.mxu0 0.0
    %211 = vmatprep.subr.mxu0 0.0
    %212 = vmatpush1.msra.mxu0 0.0
    %213 = vmatprep.mubr.f32.mxu0 0.0
    %214 = vmatmul.mubr.f32.gmra.mrb[0].mxu0 %v147
    %v215 = vpop.f32.mrb[0].mxu0
    %v216 = vadd.f32 %v143, %v215
    %v217 = vpop.f32.mrb[0].mxu0
    %v218 = vadd.f32 %v143, %v217
    %219 = vdwg.mxu0
    %vm220 = vcmp.gt.f32.partialorder %v216, 0.0
    %vm221 = vcmp.gt.f32.partialorder %v218, 0.0
    %v222 = vmul.f32 %v216, 0.01
    %v223 = vmul.f32 %v218, 0.01
    %v224 = vsel %vm220, %v216, %v222
    %v225 = vsel %vm221, %v218, %v223
    %226 = vrot.lane.b32.xlu0 %v224, 16
    %v227 = vpop.permute.xlu0 %226
    %228 = vrot.lane.b32.xlu0 %v225, 16
    %v229 = vpop.permute.xlu0 %228
    %v230 = vsel %vm74, %v227, %v229
    %v231 = vsel %vm74, %v229, %v227
    %v232 = vsel %vm62, %v231, 0.0
    %v233 = vsel %vm63, %v230, 0.0
    %234 = vrot.lane.b32.xlu0 %v224, 112
    %v235 = vpop.permute.xlu0 %234
    %236 = vrot.lane.b32.xlu0 %v225, 112
    %v237 = vpop.permute.xlu0 %236
    %v238 = vsel %vm83, %v235, %v237
    %v239 = vsel %vm83, %v237, %v235
    %v240 = vsel %vm64, %v238, 0.0
    %v241 = vsel %vm65, %v239, 0.0
    %242 = vrot.lane.b32.xlu0 %v232, 1
    %v243 = vpop.permute.xlu0 %242
    %244 = vrot.lane.b32.xlu0 %v233, 1
    %v245 = vpop.permute.xlu0 %244
    %v246 = vsel %vm92, %v243, %v245
    %v247 = vsel %vm92, %v245, %v243
    %v248 = vsel %vm66, %v247, 0.0
    %v249 = vsel %vm67, %v246, 0.0
    %250 = vrot.lane.b32.xlu0 %v232, 127
    %v251 = vpop.permute.xlu0 %250
    %252 = vrot.lane.b32.xlu0 %v233, 127
    %v253 = vpop.permute.xlu0 %252
    %v254 = vsel %vm101, %v251, %v253
    %v255 = vsel %vm101, %v253, %v251
    %v256 = vsel %vm68, %v254, 0.0
    %v257 = vsel %vm69, %v255, 0.0
    %258 = vrot.lane.b32.xlu0 %v224, 1
    %v259 = vpop.permute.xlu0 %258
    %260 = vrot.lane.b32.xlu0 %v225, 1
    %v261 = vpop.permute.xlu0 %260
    %v262 = vsel %vm92, %v259, %v261
    %v263 = vsel %vm92, %v261, %v259
    %v264 = vsel %vm66, %v263, 0.0
    %v265 = vsel %vm67, %v262, 0.0
    %266 = vrot.lane.b32.xlu0 %v224, 127
    %v267 = vpop.permute.xlu0 %266
    %268 = vrot.lane.b32.xlu0 %v225, 127
    %v269 = vpop.permute.xlu0 %268
    %v270 = vsel %vm101, %v267, %v269
    %v271 = vsel %vm101, %v269, %v267
    %v272 = vsel %vm68, %v270, 0.0
    %v273 = vsel %vm69, %v271, 0.0
    %274 = vrot.lane.b32.xlu0 %v240, 1
    %v275 = vpop.permute.xlu0 %274
    %276 = vrot.lane.b32.xlu0 %v241, 1
    %v277 = vpop.permute.xlu0 %276
    %v278 = vsel %vm92, %v275, %v277
    %v279 = vsel %vm92, %v277, %v275
    %v280 = vsel %vm66, %v279, 0.0
    %v281 = vsel %vm67, %v278, 0.0
    %282 = vrot.lane.b32.xlu0 %v240, 127
    %v283 = vpop.permute.xlu0 %282
    %284 = vrot.lane.b32.xlu0 %v241, 127
    %v285 = vpop.permute.xlu0 %284
    %v286 = vsel %vm101, %v283, %v285
    %v287 = vsel %vm101, %v285, %v283
    %v288 = vsel %vm68, %v286, 0.0
    %v289 = vsel %vm69, %v287, 0.0
    %v290 = vld [vmem:[%s3] sm:$0xff]
    %v291 = vld [vmem:[%s4] sm:$0xff]
    %293 = vset.pattern.permute.xlu0 0
    %294 = vperm.xlu0 %293, %v291
    %v295 = vpop.permute.xlu0 %294
    %v298 = vsel %vm145, %v290, 0
    %300 = vmatprep.subr.mxu0 %v249
    %301 = vmatpush1.msra.mxu0 %v248
    %302 = vmatprep.subr.mxu0 %v233
    %303 = vmatpush1.msra.mxu0 %v232
    %304 = vmatprep.subr.mxu0 %v257
    %305 = vmatpush1.msra.mxu0 %v256
    %306 = vmatprep.subr.mxu0 %v265
    %307 = vmatpush1.msra.mxu0 %v264
    %308 = vmatprep.subr.mxu0 %v225
    %309 = vmatpush1.msra.mxu0 %v224
    %310 = vmatprep.subr.mxu0 %v273
    %311 = vmatpush1.msra.mxu0 %v272
    %312 = vmatprep.subr.mxu0 %v281
    %313 = vmatpush1.msra.mxu0 %v280
    %314 = vmatprep.subr.mxu0 %v241
    %315 = vmatpush1.msra.mxu0 %v240
    %316 = vmatprep.subr.mxu0 %v289
    %317 = vmatpush1.msra.mxu0 %v288
    %318 = vmatprep.subr.mxu0 0.0
    %319 = vmatpush1.msra.mxu0 0.0
    %320 = vmatprep.subr.mxu0 0.0
    %321 = vmatpush1.msra.mxu0 0.0
    %322 = vmatprep.subr.mxu0 0.0
    %323 = vmatpush1.msra.mxu0 0.0
    %324 = vmatprep.subr.mxu0 0.0
    %325 = vmatpush1.msra.mxu0 0.0
    %326 = vmatprep.subr.mxu0 0.0
    %327 = vmatpush1.msra.mxu0 0.0
    %328 = vmatprep.subr.mxu0 0.0
    %329 = vmatpush1.msra.mxu0 0.0
    %330 = vmatprep.subr.mxu0 0.0
    %331 = vmatpush1.msra.mxu0 0.0
    %332 = vmatprep.subr.mxu0 0.0
    %333 = vmatpush1.msra.mxu0 0.0
    %334 = vmatprep.subr.mxu0 0.0
    %335 = vmatpush1.msra.mxu0 0.0
    %336 = vmatprep.subr.mxu0 0.0
    %337 = vmatpush1.msra.mxu0 0.0
    %338 = vmatprep.subr.mxu0 0.0
    %339 = vmatpush1.msra.mxu0 0.0
    %340 = vmatprep.subr.mxu0 0.0
    %341 = vmatpush1.msra.mxu0 0.0
    %342 = vmatprep.subr.mxu0 0.0
    %343 = vmatpush1.msra.mxu0 0.0
    %344 = vmatprep.subr.mxu0 0.0
    %345 = vmatpush1.msra.mxu0 0.0
    %346 = vmatprep.subr.mxu0 0.0
    %347 = vmatpush1.msra.mxu0 0.0
    %348 = vmatprep.subr.mxu0 0.0
    %349 = vmatpush1.msra.mxu0 0.0
    %350 = vmatprep.subr.mxu0 0.0
    %351 = vmatpush1.msra.mxu0 0.0
    %352 = vmatprep.subr.mxu0 0.0
    %353 = vmatpush1.msra.mxu0 0.0
    %354 = vmatprep.subr.mxu0 0.0
    %355 = vmatpush1.msra.mxu0 0.0
    %356 = vmatprep.subr.mxu0 0.0
    %357 = vmatpush1.msra.mxu0 0.0
    %358 = vmatprep.subr.mxu0 0.0
    %359 = vmatpush1.msra.mxu0 0.0
    %360 = vmatprep.subr.mxu0 0.0
    %361 = vmatpush1.msra.mxu0 0.0
    %362 = vmatprep.subr.mxu0 0.0
    %363 = vmatpush1.msra.mxu0 0.0
    %364 = vmatprep.mubr.f32.mxu0 0.0
    %365 = vmatmul.mubr.f32.gmra.mrb[0].mxu0 %v298
    %v366 = vpop.f32.mrb[0].mxu0
    %v367 = vadd.f32 %v295, %v366
    %v368 = vpop.f32.mrb[0].mxu0
    %v369 = vadd.f32 %v295, %v368
    %370 = vdwg.mxu0
    %v371 = vadd.f32 %v33, %v367
    %v372 = vadd.f32 %v34, %v369
    %373 = vst [vmem:[#allocation5] sm:$0xff] %v371
    %374 = vst [vmem:[#allocation5 + $0x8] sm:$0xff] %v372
    // Predicated region
    $region26: #{tpu_custom_call.1} parent=1 // pred_check
      _
    $region27: #{tpu_custom_call.1} parent=1 // pred_check_branch
      %376 = sbr.rel (0) target = $region29
    $region28: #{tpu_custom_call.1} parent=1 // pred_region
      %s378 = ssub.s32 256, 256
      %379 = vsyncadd [#allocation4], %s378
      %s381 = sshll.u32 [#allocation5], 4
      %s382 = int_to_ptr.vmem [resolvable:$true] %s381
      %384 = dma.vmem_to_hbm [thread:$0]  %s382, 256, %s5, [#allocation4]
    $region29: #{tpu_custom_call.1} parent=1 // pred_fallthru
      _
    // Predicated region
    $region30: #{tpu_custom_call.1} parent=1 // pred_check
      _
    $region31: #{tpu_custom_call.1} parent=1 // pred_check_branch
      %386 = sbr.rel (0) target = $region33
    $region32: #{tpu_custom_call.1} parent=1 // pred_region
      %387 = dma.done [#allocation4], 256
    $region33: #{tpu_custom_call.1} parent=1 // pred_fallthru
      _
    %388 = vsyncpa [#allocation3], 1
    %389 = vsyncpa [#allocation4], 1

</llo_original>
